<compile_context>
chip_gen: v7x
topology: tpu7x:2x2x1
jax: 0.10.0
libtpu: 0.0.40
codegen_flags: <defaults>
</compile_context>

<pallas_src>
import functools

import jax
import jax.numpy as jnp
import numpy as np
from jax.experimental import pallas as pl
from jax.experimental.pallas import tpu as pltpu


# --------------------------------------------------------------------------- #
# Kernel
# --------------------------------------------------------------------------- #
def _pad_kernel(x_ref, o_ref, *, in_dims):
    """Copy the interior of x_ref into o_ref, zero only the trailing pad strips.

    Axis 0 of both refs is the (never padded) NC block.  `in_dims` are the
    interior extents along the remaining output axes (all Python ints), so
    every slice below is static.  Works for 3-D and 4-D blocks.
    """
    dt = o_ref.dtype
    b = o_ref.shape[0]
    out_dims = tuple(o_ref.shape[1:])

    if len(out_dims) == 2:
        # Collapsed layout: (nc_blk, d, L) -> (nc_blk, d_out, L_out)
        d_in, l_in = in_dims
        d_out, l_out = out_dims
        # Interior: copied exactly once, single slab assignment (no loop).
        o_ref[:, :d_in, :l_in] = x_ref[...]
        if l_out > l_in:                      # trailing strip on the lane axis
            o_ref[:, :d_in, l_in:] = jnp.zeros((b, d_in, l_out - l_in), dt)
        if d_out > d_in:                      # trailing depth slab (pure pad)
            o_ref[:, d_in:, :] = jnp.zeros((b, d_out - d_in, l_out), dt)
    else:
        # Full layout (W is padded): (nc_blk, d, h, w) -> (nc_blk, d_o, h_o, w_o)
        d_in, h_in, w_in = in_dims
        d_out, h_out, w_out = out_dims
        o_ref[:, :d_in, :h_in, :w_in] = x_ref[...]
        if w_out > w_in:                      # right strip (all rows)
            o_ref[:, :d_in, :, w_in:] = jnp.zeros(
                (b, d_in, h_out, w_out - w_in), dt)
        if h_out > h_in:                      # bottom strip (interior cols only)
            o_ref[:, :d_in, h_in:, :w_in] = jnp.zeros(
                (b, d_in, h_out - h_in, w_in), dt)
        if d_out > d_in:                      # trailing depth slab (pure pad)
            o_ref[:, d_in:, :, :] = jnp.zeros(
                (b, d_out - d_in, h_out, w_out), dt)


# --------------------------------------------------------------------------- #
# Sizing helpers
# --------------------------------------------------------------------------- #
def _ceil_to(x, m):
    return -(-x // m) * m


def _tiled_bytes(block_shape, itemsize):
    """Real (sublane,128)-tiled VMEM footprint of one buffer of `block_shape`."""
    sub = max(8, 32 // itemsize)              # 8 f32, 16 bf16, 32 int8
    lead = 1
    for s in block_shape[:-2]:
        lead *= int(s)
    s2, s1 = int(block_shape[-2]), int(block_shape[-1])
    return lead * _ceil_to(s2, sub) * _ceil_to(s1, 128) * itemsize


def _vmem_info():
    """(double-buffer budget, vmem_limit ceiling) — generation aware."""
    cap = 64 << 20                            # conservative default (v7x per-TC)
    try:
        info = pltpu.get_tpu_info()
        cap = int(getattr(info, "vmem_capacity_bytes", cap))
    except Exception:
        pass
    budget = max(16 << 20, cap // 2 - (8 << 20))   # ~24 MiB v7x, ~56 MiB v5e/v6e
    ceiling = max(32 << 20, cap - (16 << 20))      # leave compiler scratch room
    return budget, ceiling


def _pick_block_nc(nc, footprint_fn, vmem_budget,
                   target_steps=8, min_step_bytes=1 << 20):
    """Pick a divisor of nc as the NC block size.

    Constraints: double-buffered (in+out) tiled footprint <= vmem_budget, and
    at least 2 grid steps whenever nc >= 2 (v7x megacore sharding / pipelining).
    Preference: ~target_steps steps, but never shrink a step below ~1 MiB of
    HBM traffic (per-step pipeline overhead dominates otherwise).
    """
    divisors = [b for b in range(1, nc + 1) if nc % b == 0]

    feas = [b for b in divisors if footprint_fn(b) <= vmem_budget]
    cap = max(feas) if feas else 1
    if nc >= 2:                               # guarantee >= 2 grid steps
        cap = min(cap, nc // 2)
    cap = max(b for b in divisors if b <= max(cap, 1))

    want = max(1, nc // target_steps)
    floor = cap
    for b in divisors:                        # smallest block with >= 1 MiB traffic
        if footprint_fn(b) // 2 >= min_step_bytes:
            floor = b
            break
    b_nc = min(cap, max(want, floor))
    b_nc = max(b for b in divisors if b <= max(b_nc, 1))
    return max(1, b_nc)


# --------------------------------------------------------------------------- #
# Wrapper
# --------------------------------------------------------------------------- #
def pad_layer(x, pad_dims):
    """JAX/Pallas equivalent of PadLayer(pad_dims).forward(x) for 5-D NCDHW x."""
    pd, ph, pw = int(pad_dims[0]), int(pad_dims[1]), int(pad_dims[2])
    if pd + ph + pw == 0:
        return x

    n, c, d, h, w = x.shape
    d_out, h_out, w_out = d + pd, h + ph, w + pw
    nc = n * c
    itemsize = np.dtype(x.dtype).itemsize

    # Collapse trailing dims down to the innermost padded axis (lane-dense).
    if pw > 0:
        in_trail, out_trail = (d, h, w), (d_out, h_out, w_out)
        x_k = x.reshape(nc, d, h, w)
    elif ph > 0:
        in_trail, out_trail = (d, h * w), (d_out, h_out * w)
        x_k = x.reshape(nc, d, h * w)
    else:  # only D padded
        in_trail, out_trail = (1, d * h * w), (1, d_out * h * w)
        x_k = x.reshape(nc, 1, d * h * w)

    def footprint(b):  # double-buffered in + out, real tiled footprint
        return 2 * (_tiled_bytes((b,) + in_trail, itemsize)
                    + _tiled_bytes((b,) + out_trail, itemsize))

    vmem_budget, vmem_ceiling = _vmem_info()
    b_nc = _pick_block_nc(nc, footprint, vmem_budget)

    need = footprint(b_nc)
    vmem_limit = int(min(vmem_ceiling, max(32 << 20, need + (8 << 20))))

    nd = len(in_trail)
    zeros_idx = (0,) * nd
    in_spec = pl.BlockSpec((b_nc,) + in_trail, lambda i: (i,) + zeros_idx)
    out_spec = pl.BlockSpec((b_nc,) + out_trail, lambda i: (i,) + zeros_idx)

    out = pl.pallas_call(
        functools.partial(_pad_kernel, in_dims=in_trail),
        out_shape=jax.ShapeDtypeStruct((nc,) + out_trail, x.dtype),
        grid=(nc // b_nc,),
        in_specs=[in_spec],
        out_specs=out_spec,
        compiler_params=pltpu.CompilerParams(
            dimension_semantics=("parallel",),
            vmem_limit_bytes=vmem_limit,
        ),
    )(x_k)

    return out.reshape(n, c, d_out, h_out, w_out)


# --------------------------------------------------------------------------- #
# Self-test
# --------------------------------------------------------------------------- #
if __name__ == "__main__":
    key = jax.random.PRNGKey(0)
    # Small 5-D NCDHW input consistent with the 3-D feature-extraction module.
    N, C, D, H, W = 2, 3, 5, 6, 7
    x = jax.random.normal(key, (N, C, D, H, W), dtype=jnp.float32)

    def ref_pad(x, pads):
        pd, ph, pw = pads
        return jnp.pad(x, ((0, 0), (0, 0), (0, pd), (0, ph), (0, pw)),
                       mode="constant", constant_values=0.0)

    # Exercise every layout path: full 4-D, H-only / D+H collapsed 3-D,
    # D-only fully collapsed, and W-only.
    for pads in [(1, 2, 3), (0, 2, 0), (1, 3, 0), (2, 0, 0), (0, 0, 5)]:
        y = jax.block_until_ready(pad_layer(x, pads))
        r = ref_pad(x, pads)
        assert y.shape == r.shape, (pads, y.shape, r.shape)
        assert np.allclose(np.asarray(y), np.asarray(r)), pads

    # sum(pad_dims) == 0 fast path returns x unchanged.
    y0 = jax.block_until_ready(pad_layer(x, (0, 0, 0)))
    assert np.allclose(np.asarray(y0), np.asarray(x))

    print("KERNEL_OK")
</pallas_src>

<mosaic_0001>
module attributes {stable_mosaic.version = 11 : i64} {
  func.func @_pad_kernel(%arg0: i32, %arg1: memref<3x5x6x7xf32, #tpu.memory_space<vmem>>, %arg2: memref<3x6x8x10xf32, #tpu.memory_space<vmem>>) attributes {dimension_semantics = [#tpu.dimension_semantics<parallel>], iteration_bounds = array<i64: 2>, scalar_prefetch = 0 : i64, scratch_operands = 0 : i64, tpu.core_type = #tpu.core_type<tc>, window_params = [{transform_indices = @transform_0, window_bounds = array<i64: 3, 5, 6, 7>}, {transform_indices = @transform_1, window_bounds = array<i64: 3, 6, 8, 10>}]} {
    %c0 = arith.constant 0 : index
    %c0_0 = arith.constant 0 : index
    %c0_1 = arith.constant 0 : index
    %c0_2 = arith.constant 0 : index
    %0 = vector.load %arg1[%c0, %c0_0, %c0_1, %c0_2] : memref<3x5x6x7xf32, #tpu.memory_space<vmem>>, vector<3x5x6x7xf32>
    %c0_3 = arith.constant 0 : index
    %c0_4 = arith.constant 0 : index
    %c0_5 = arith.constant 0 : index
    %c0_6 = arith.constant 0 : index
    %1 = vector.load %arg2[%c0_3, %c0_4, %c0_5, %c0_6] : memref<3x6x8x10xf32, #tpu.memory_space<vmem>>, vector<3x5x6x7xf32>
    tpu.vector_store %arg2[%c0_3, %c0_4, %c0_5, %c0_6], %0 {strides = array<i32>} : memref<3x6x8x10xf32, #tpu.memory_space<vmem>>, vector<3x5x6x7xf32>,
    %cst = arith.constant 0.000000e+00 : f32
    %2 = vector.broadcast %cst : f32 to vector<3x5x8x3xf32>
    %c0_7 = arith.constant 0 : index
    %c0_8 = arith.constant 0 : index
    %c0_9 = arith.constant 0 : index
    %c7 = arith.constant 7 : index
    %3 = vector.load %arg2[%c0_7, %c0_8, %c0_9, %c7] : memref<3x6x8x10xf32, #tpu.memory_space<vmem>>, vector<3x5x8x3xf32>
    tpu.vector_store %arg2[%c0_7, %c0_8, %c0_9, %c7], %2 {strides = array<i32>} : memref<3x6x8x10xf32, #tpu.memory_space<vmem>>, vector<3x5x8x3xf32>,
    %cst_10 = arith.constant 0.000000e+00 : f32
    %4 = vector.broadcast %cst_10 : f32 to vector<3x5x2x7xf32>
    %c0_11 = arith.constant 0 : index
    %c0_12 = arith.constant 0 : index
    %c6 = arith.constant 6 : index
    %c0_13 = arith.constant 0 : index
    %5 = vector.load %arg2[%c0_11, %c0_12, %c6, %c0_13] : memref<3x6x8x10xf32, #tpu.memory_space<vmem>>, vector<3x5x2x7xf32>
    tpu.vector_store %arg2[%c0_11, %c0_12, %c6, %c0_13], %4 {strides = array<i32>} : memref<3x6x8x10xf32, #tpu.memory_space<vmem>>, vector<3x5x2x7xf32>,
    %cst_14 = arith.constant 0.000000e+00 : f32
    %6 = vector.broadcast %cst_14 : f32 to vector<3x1x8x10xf32>
    %c0_15 = arith.constant 0 : index
    %c5 = arith.constant 5 : index
    %c0_16 = arith.constant 0 : index
    %c0_17 = arith.constant 0 : index
    %7 = vector.load %arg2[%c0_15, %c5, %c0_16, %c0_17] : memref<3x6x8x10xf32, #tpu.memory_space<vmem>>, vector<3x1x8x10xf32>
    tpu.vector_store %arg2[%c0_15, %c5, %c0_16, %c0_17], %6 {strides = array<i32>} : memref<3x6x8x10xf32, #tpu.memory_space<vmem>>, vector<3x1x8x10xf32>,
    return
  }
  func.func @transform_0(%arg0: i32) -> (i32, i32, i32, i32) {
    %c0_i32 = arith.constant 0 : i32
    %c0_i32_0 = arith.constant 0 : i32
    %c0_i32_1 = arith.constant 0 : i32
    %c0_i32_2 = arith.constant 0 : i32
    return %arg0, %c0_i32, %c0_i32_0, %c0_i32_1 : i32, i32, i32, i32
  }
  func.func @transform_1(%arg0: i32) -> (i32, i32, i32, i32) {
    %c0_i32 = arith.constant 0 : i32
    %c0_i32_0 = arith.constant 0 : i32
    %c0_i32_1 = arith.constant 0 : i32
    %c0_i32_2 = arith.constant 0 : i32
    return %arg0, %c0_i32, %c0_i32_0, %c0_i32_1 : i32, i32, i32, i32
  }
}

</mosaic_0001>

<llo_original>
// kernel: tpu_custom_call.1
$region0: #{tpu_custom_call.1}
  #allocation0 [shape = 'u32[]', space=smem, size = 0x4, offset = 0x4, fixed_abs, tag = 'smem constant byte address 0x4 - core index']
  #allocation1 [shape = 'u32[144,128]{1,0:T(1,128)}', space=vmem, size = 0x12000, scoped, tag = 'internal scratch']
  %s0 = inlined_call_operand.hbm [shape: f32[6,5,6,7], index: 0, kind: input, shape index: {}]
  %s1 = inlined_call_operand.hbm [shape: f32[6,6,8,10], index: 1, kind: output, shape index: {}]
  %s2 = sld [smem:[#allocation0]]
  $region41: #{tpu_custom_call.1} parent=0
    _
  %s4 = ssub.s32 1, %s2
  %s5 = scalar_select 0, %s4, %s2
  $region1: #{tpu_custom_call.1} parent=0
    #allocation2 [shape = 'u8[122880]{0}', space=vmem, size = 0x1e000, scoped, tag = 'input window, operand 0']
    #allocation3 [shape = 's32[2]{0}', space=sflag, size = 0x8, scoped, tag = 'scoped memory for tpu_custom_call.1']
    #allocation4 [shape = 's32[2]{0}', space=sflag, size = 0x8, scoped, tag = 'scoped memory for tpu_custom_call.1']
    #allocation5 [shape = 'u8[147456]{0}', space=vmem, size = 0x24000, scoped, tag = 'output window, operand 0']
    %6 = vsyncpa [#allocation3], 0
    %s7 = scalar_lea.sflag [#allocation3], 1
    %8 = vsyncpa %s7, 0
    %9 = vsyncpa [#allocation4], 0
    %s10 = scalar_lea.sflag [#allocation4], 1
    %11 = vsyncpa %s10, 0
    loop: start=0, step=1, limit=4
    $region2: #{tpu_custom_call.1} parent=1 // loop_pre_header
      _
    $region3: #{tpu_custom_call.1} parent=1 // loop_header
      %s13 = sphi 0, %s17
      %p14 = scmp.ge.s32.totalorder %s13, 4
      %s23 = sphi 0, %s25
      %s26 = sphi 0, %s23
      %s27 = sphi 0, %s26
      %s43 = sphi 0, %s27
      %s49 = sphi 0, %s51
      %s52 = sphi 0, %s49
      %s53 = sphi 0, %s52
      %s69 = sphi 0, %s53
    $region4: #{tpu_custom_call.1} parent=1 // loop_header_branch
      %16 = sbr.rel (%p14) target = $region8
    $region5: #{tpu_custom_call.1} parent=1 // loop_body
      %s18 = ssub.s32 %s13, 1
      %s19 = ssub.s32 %s13, 2
      %s20 = sadd.s32 %s13, 1
      %s21 = ssub.s32 %s13, %s20
      %p22 = scmp.eq.s32.totalorder %s21, 0
      %s24 = sadd.s32 %s23, 1
      %s25 = scalar_select %p22, %s23, %s24
      %p28 = pneg %p22
      %p29 = scmp.eq.s32.totalorder %s13, 1
      %p30 = por %p28, %p29
      %p31 = scmp.ne.s32.totalorder %s23, %s26
      %p32 = scmp.eq.s32.totalorder %s13, 0
      %p33 = por %p31, %p32
      %p34 = scmp.ne.s32.totalorder %s23, %s26
      %p35 = scmp.eq.s32.totalorder %s18, 1
      %p36 = por %p34, %p35
      %p37 = scmp.ne.s32.totalorder %s26, %s27
      %p38 = scmp.eq.s32.totalorder %s18, 0
      %p39 = por %p37, %p38
      %p40 = scmp.ne.s32.totalorder %s26, %s27
      %p41 = scmp.eq.s32.totalorder %s19, 1
      %p42 = por %p40, %p41
      %p44 = scmp.ne.s32.totalorder %s27, %s43
      %p45 = scmp.eq.s32.totalorder %s19, 0
      %p46 = por %p44, %p45
      %s47 = ssub.s32 %s13, %s20
      %p48 = scmp.eq.s32.totalorder %s47, 0
      %s50 = sadd.s32 %s49, 1
      %s51 = scalar_select %p48, %s49, %s50
      %p54 = pneg %p48
      %p55 = scmp.eq.s32.totalorder %s13, 1
      %p56 = por %p54, %p55
      %p57 = scmp.ne.s32.totalorder %s49, %s52
      %p58 = scmp.eq.s32.totalorder %s13, 0
      %p59 = por %p57, %p58
      %p60 = scmp.ne.s32.totalorder %s49, %s52
      %p61 = scmp.eq.s32.totalorder %s18, 1
      %p62 = por %p60, %p61
      %p63 = scmp.ne.s32.totalorder %s52, %s53
      %p64 = scmp.eq.s32.totalorder %s18, 0
      %p65 = por %p63, %p64
      %p66 = scmp.ne.s32.totalorder %s52, %s53
      %p67 = scmp.eq.s32.totalorder %s19, 1
      %p68 = por %p66, %p67
      %p70 = scmp.ne.s32.totalorder %s53, %s69
      %p71 = scmp.eq.s32.totalorder %s19, 0
      %p72 = por %p70, %p71
      %p73 = scmp.le.s32.totalorder 1, %s13
      %p74 = scmp.lt.s32.totalorder %s13, 3
      %p75 = pnand %p73, %p74
      %p76 = pneg %p75
      // Predicated region
      $region9: #{tpu_custom_call.1} parent=5 // pred_check
        _
      $region10: #{tpu_custom_call.1} parent=5 // pred_check_branch
        %78 = sbr.rel (%p75) target = $region12
      $region11: #{tpu_custom_call.1} parent=5 // pred_region
        %s79 = ssub.s32 %s13, 1
      $region12: #{tpu_custom_call.1} parent=5 // pred_fallthru
        _
      %p80 = scmp.lt.s32.totalorder %s13, 2
      // Predicated region
      $region13: #{tpu_custom_call.1} parent=5 // pred_check
        %p81 = pneg %p80
      $region14: #{tpu_custom_call.1} parent=5 // pred_check_branch
        %83 = sbr.rel (%p81) target = $region16
      $region15: #{tpu_custom_call.1} parent=5 // pred_region
        // Predicated region
        $region17: #{tpu_custom_call.1} parent=15 // pred_check
          %p84 = pneg %p33
        $region18: #{tpu_custom_call.1} parent=15 // pred_check_branch
          %86 = sbr.rel (%p84) target = $region20
        $region19: #{tpu_custom_call.1} parent=15 // pred_region
          %s87 = sand.u32 %s23, 1
          %s88 = scalar_lea.sflag [#allocation3], %s87
          %s89 = sand.u32 %s23, 1
          %s90 = smul.addr %s89, 120
          %s91 = scalar_lea.vmem [#allocation2], %s90
          %s92 = smul.u32 3, %s13
          %s94 = ssub.s32 1920, 1920
          %95 = vsyncadd %s88, %s94
          %s96 = smul.addr %s92, 5
          %s97 = smul.addr %s96, 128
          %s98 = scalar_lea.hbm %s0, %s97
          %s99 = sshll.u32 %s91, 4
          %s100 = int_to_ptr.vmem [resolvable:$true] %s99
          %105 = dma.hbm_to_vmem [thread:$0]  %s98, 1920, %s100, %s88, 128, 128, 8
        $region20: #{tpu_custom_call.1} parent=15 // pred_fallthru
          _
      $region16: #{tpu_custom_call.1} parent=5 // pred_fallthru
        _
      %p106 = scmp.le.s32.totalorder 1, %s13
      %p107 = scmp.lt.s32.totalorder %s13, 3
      %p108 = pnand %p106, %p107
      %p109 = pneg %p108
      // Predicated region
      $region21: #{tpu_custom_call.1} parent=5 // pred_check
        _
      $region22: #{tpu_custom_call.1} parent=5 // pred_check_branch
        %111 = sbr.rel (%p108) target = $region24
      $region23: #{tpu_custom_call.1} parent=5 // pred_region
        %s112 = ssub.s32 %s13, 1
        %s113 = sand.u32 %s26, 1
        %s114 = scalar_lea.sflag [#allocation3], %s113
        %s115 = sand.u32 %s26, 1
        %s116 = smul.addr %s115, 120
        %s117 = scalar_lea.vmem [#allocation2], %s116
        // Predicated region
        $region25: #{tpu_custom_call.1} parent=23 // pred_check
          %p118 = pneg %p39
        $region26: #{tpu_custom_call.1} parent=23 // pred_check_branch
          %120 = sbr.rel (%p118) target = $region28
        $region27: #{tpu_custom_call.1} parent=23 // pred_region
          %121 = dma.done %s114, 1920
        $region28: #{tpu_custom_call.1} parent=23 // pred_fallthru
          _
        %s122 = sand.u32 %s26, 1
        %s123 = scalar_lea.sflag [#allocation3], %s122
        %s124 = sand.u32 %s26, 1
        %s125 = smul.addr %s124, 120
        %s126 = scalar_lea.vmem [#allocation2], %s125
        %p127 = pneg %p39
        %p128 = pneg %p36
        %p129 = pneg %p65
        %p130 = pneg %p62
        %s131 = sand.u32 %s52, 1
        %s132 = scalar_lea.sflag [#allocation4], %s131
        %s133 = sand.u32 %s52, 1
        %s134 = smul.addr %s133, 144
        %s135 = scalar_lea.vmem [#allocation5], %s134
        %s136 = smul.u32 3, %s18
        %s137 = smul.u32 3, %s18
        %v138 = vld [vmem:[%s117] sm:$0x3f]
        %v139 = vld [vmem:[%s117 + $0x8] sm:$0x3f]
        %v140 = vld [vmem:[%s117 + $0x10] sm:$0x3f]
        %v141 = vld [vmem:[%s117 + $0x18] sm:$0x3f]
        %v142 = vld [vmem:[%s117 + $0x20] sm:$0x3f]
        %v143 = vld [vmem:[%s117 + $0x28] sm:$0x3f]
        %v144 = vld [vmem:[%s117 + $0x30] sm:$0x3f]
        %v145 = vld [vmem:[%s117 + $0x38] sm:$0x3f]
        %v146 = vld [vmem:[%s117 + $0x40] sm:$0x3f]
        %v147 = vld [vmem:[%s117 + $0x48] sm:$0x3f]
        %v148 = vld [vmem:[%s117 + $0x50] sm:$0x3f]
        %v149 = vld [vmem:[%s117 + $0x58] sm:$0x3f]
        %v150 = vld [vmem:[%s117 + $0x60] sm:$0x3f]
        %v151 = vld [vmem:[%s117 + $0x68] sm:$0x3f]
        %v152 = vld [vmem:[%s117 + $0x70] sm:$0x3f]
        %vm153 = vcmask 54272
        %154 = vst.msk [vmem:[%s135] sm:$0x3f] %vm153, %v138
        %155 = vst.msk [vmem:[%s135 + $0x8] sm:$0x3f] %vm153, %v139
        %156 = vst.msk [vmem:[%s135 + $0x10] sm:$0x3f] %vm153, %v140
        %157 = vst.msk [vmem:[%s135 + $0x18] sm:$0x3f] %vm153, %v141
        %158 = vst.msk [vmem:[%s135 + $0x20] sm:$0x3f] %vm153, %v142
        %159 = vst.msk [vmem:[%s135 + $0x30] sm:$0x3f] %vm153, %v143
        %160 = vst.msk [vmem:[%s135 + $0x38] sm:$0x3f] %vm153, %v144
        %161 = vst.msk [vmem:[%s135 + $0x40] sm:$0x3f] %vm153, %v145
        %162 = vst.msk [vmem:[%s135 + $0x48] sm:$0x3f] %vm153, %v146
        %163 = vst.msk [vmem:[%s135 + $0x50] sm:$0x3f] %vm153, %v147
        %164 = vst.msk [vmem:[%s135 + $0x60] sm:$0x3f] %vm153, %v148
        %165 = vst.msk [vmem:[%s135 + $0x68] sm:$0x3f] %vm153, %v149
        %166 = vst.msk [vmem:[%s135 + $0x70] sm:$0x3f] %vm153, %v150
        %167 = vst.msk [vmem:[%s135 + $0x78] sm:$0x3f] %vm153, %v151
        %168 = vst.msk [vmem:[%s135 + $0x80] sm:$0x3f] %vm153, %v152
        %vm169 = vcmask 80952
        %170 = vst.msk [vmem:[%s135] sm:$0xff] %vm169, 0.0
        %171 = vst.msk [vmem:[%s135 + $0x8] sm:$0xff] %vm169, 0.0
        %172 = vst.msk [vmem:[%s135 + $0x10] sm:$0xff] %vm169, 0.0
        %173 = vst.msk [vmem:[%s135 + $0x18] sm:$0xff] %vm169, 0.0
        %174 = vst.msk [vmem:[%s135 + $0x20] sm:$0xff] %vm169, 0.0
        %175 = vst.msk [vmem:[%s135 + $0x30] sm:$0xff] %vm169, 0.0
        %176 = vst.msk [vmem:[%s135 + $0x38] sm:$0xff] %vm169, 0.0
        %177 = vst.msk [vmem:[%s135 + $0x40] sm:$0xff] %vm169, 0.0
        %178 = vst.msk [vmem:[%s135 + $0x48] sm:$0xff] %vm169, 0.0
        %179 = vst.msk [vmem:[%s135 + $0x50] sm:$0xff] %vm169, 0.0
        %180 = vst.msk [vmem:[%s135 + $0x60] sm:$0xff] %vm169, 0.0
        %181 = vst.msk [vmem:[%s135 + $0x68] sm:$0xff] %vm169, 0.0
        %182 = vst.msk [vmem:[%s135 + $0x70] sm:$0xff] %vm169, 0.0
        %183 = vst.msk [vmem:[%s135 + $0x78] sm:$0xff] %vm169, 0.0
        %184 = vst.msk [vmem:[%s135 + $0x80] sm:$0xff] %vm169, 0.0
        %vm185 = vcmask 50176
        %186 = vst.msk [vmem:[%s135 + $0x6] sm:$0x3] %vm185, 0.0
        %187 = vst.msk [vmem:[%s135 + $0xe] sm:$0x3] %vm185, 0.0
        %188 = vst.msk [vmem:[%s135 + $0x16] sm:$0x3] %vm185, 0.0
        %189 = vst.msk [vmem:[%s135 + $0x1e] sm:$0x3] %vm185, 0.0
        %190 = vst.msk [vmem:[%s135 + $0x26] sm:$0x3] %vm185, 0.0
        %191 = vst.msk [vmem:[%s135 + $0x36] sm:$0x3] %vm185, 0.0
        %192 = vst.msk [vmem:[%s135 + $0x3e] sm:$0x3] %vm185, 0.0
        %193 = vst.msk [vmem:[%s135 + $0x46] sm:$0x3] %vm185, 0.0
        %194 = vst.msk [vmem:[%s135 + $0x4e] sm:$0x3] %vm185, 0.0
        %195 = vst.msk [vmem:[%s135 + $0x56] sm:$0x3] %vm185, 0.0
        %196 = vst.msk [vmem:[%s135 + $0x66] sm:$0x3] %vm185, 0.0
        %197 = vst.msk [vmem:[%s135 + $0x6e] sm:$0x3] %vm185, 0.0
        %198 = vst.msk [vmem:[%s135 + $0x76] sm:$0x3] %vm185, 0.0
        %199 = vst.msk [vmem:[%s135 + $0x7e] sm:$0x3] %vm185, 0.0
        %200 = vst.msk [vmem:[%s135 + $0x86] sm:$0x3] %vm185, 0.0
        %s201 = scalar_lea.vmem %s135, 40 [#allocation5]
        %vm202 = vcmask 80896
        %203 = vst.msk [vmem:[%s201] sm:$0xff] %vm202, 0.0
        %204 = vst.msk [vmem:[%s201 + $0x30] sm:$0xff] %vm202, 0.0
        %205 = vst.msk [vmem:[%s201 + $0x60] sm:$0xff] %vm202, 0.0
        %s206 = sand.u32 %s52, 1
        %s207 = scalar_lea.sflag [#allocation4], %s206
        %s208 = sand.u32 %s52, 1
        %s209 = smul.addr %s208, 144
        %s210 = scalar_lea.vmem [#allocation5], %s209
        // Predicated region
        $region29: #{tpu_custom_call.1} parent=23 // pred_check
          %p211 = pneg %p62
        $region30: #{tpu_custom_call.1} parent=23 // pred_check_branch
          %213 = sbr.rel (%p211) target = $region32
        $region31: #{tpu_custom_call.1} parent=23 // pred_region
          %s214 = smul.u32 3, %s18
          %s216 = ssub.s32 2304, 2304
          %217 = vsyncadd %s207, %s216
          %s218 = smul.addr %s214, 6
          %s219 = smul.addr %s218, 128
          %s220 = scalar_lea.hbm %s1, %s219
          %s221 = sshll.u32 %s210, 4
          %s222 = int_to_ptr.vmem [resolvable:$true] %s221
          %227 = dma.vmem_to_hbm [thread:$0]  %s222, 2304, %s220, %s207, 128, 128, 8
        $region32: #{tpu_custom_call.1} parent=23 // pred_fallthru
          _
      $region24: #{tpu_custom_call.1} parent=5 // pred_fallthru
        _
      %p228 = scmp.le.s32.totalorder 2, %s13
      // Predicated region
      $region33: #{tpu_custom_call.1} parent=5 // pred_check
        %p229 = pneg %p228
      $region34: #{tpu_custom_call.1} parent=5 // pred_check_branch
        %231 = sbr.rel (%p229) target = $region36
      $region35: #{tpu_custom_call.1} parent=5 // pred_region
        %s232 = ssub.s32 %s13, 2
        // Predicated region
        $region37: #{tpu_custom_call.1} parent=35 // pred_check
          %p233 = pneg %p68
        $region38: #{tpu_custom_call.1} parent=35 // pred_check_branch
          %235 = sbr.rel (%p233) target = $region40
        $region39: #{tpu_custom_call.1} parent=35 // pred_region
          %s236 = sand.u32 %s53, 1
          %s237 = scalar_lea.sflag [#allocation4], %s236
          %s238 = sand.u32 %s53, 1
          %s239 = smul.addr %s238, 144
          %s240 = scalar_lea.vmem [#allocation5], %s239
          %241 = dma.done %s237, 2304
        $region40: #{tpu_custom_call.1} parent=35 // pred_fallthru
          _
      $region36: #{tpu_custom_call.1} parent=5 // pred_fallthru
        _
    $region6: #{tpu_custom_call.1} parent=1 // loop_footer
      %s17 = sadd.s32 1, %s13
    $region7: #{tpu_custom_call.1} parent=1 // loop_footer_branch
      %12 = sbr.rel target = $region3
    $region8: #{tpu_custom_call.1} parent=1 // loop_exit
      _
    %242 = vsyncpa [#allocation3], 1
    %s243 = scalar_lea.sflag [#allocation3], 1
    %244 = vsyncpa %s243, 1
    %245 = vsyncpa [#allocation4], 1
    %s246 = scalar_lea.sflag [#allocation4], 1
    %247 = vsyncpa %s246, 1

</llo_original>
